<compile_context>
chip_gen: v7x
topology: tpu7x:2x2x1
jax: 0.10.0
libtpu: 0.0.40
codegen_flags: <defaults>
</compile_context>

<pallas_src>
import jax
import jax.numpy as jnp
from jax.experimental import pallas as pl
from jax.experimental.pallas import tpu as pltpu

IN_CH = 3
HIDDEN = 32
NUM_CLASSES = 17 * 2       # 34, split into two 17-class heads (left / right)
HALF = 17
LANE = 128
TILE_PIX_MAX = 4096        # pixels (lanes) per grid step; sweepable 2048-8192


def _round_up(n, m):
    return ((n + m - 1) // m) * m


def segm_kernel(x_ref, w1t_ref, b1_ref, w2t_ref, b2_ref, logits_ref, masks_ref):
    # x: (IN_CH, tile)  channel-major, pixels on lanes
    xb = x_ref[0]
    w1t = w1t_ref[...]                         # (HIDDEN, IN_CH)

    # Layer 1 (K=3): VPU broadcast FMAs instead of a tiny MXU matmul.
    h = w1t[:, 0:1] * xb[0:1, :] + b1_ref[...]           # (HIDDEN, tile)
    for c in range(1, IN_CH):
        h = h + w1t[:, c:c + 1] * xb[c:c + 1, :]
    h = jnp.maximum(h, 0.0)

    # Layer 2: (34, 32) @ (32, tile) on the MXU, long axis on lanes.
    logits = jnp.dot(w2t_ref[...], h,
                     preferred_element_type=jnp.float32) + b2_ref[...]
    logits_ref[0] = logits                                # (NUM_CLASSES, tile)

    # map2labels: first-occurrence argmax over the channel (sublane) axis for
    # each 17-class half; single shared iota for both halves.
    logits_l = logits[:HALF, :]                           # (17, tile)
    logits_r = logits[HALF:, :]                           # (17, tile)
    idx = jax.lax.broadcasted_iota(jnp.int32, logits_l.shape, 0)

    def _argmax_ch(z):
        m = jnp.max(z, axis=0, keepdims=True)
        first = jnp.where(z == m, idx, HALF)
        return jnp.min(first, axis=0, keepdims=True)      # (1, tile) int32

    masks_ref[0] = jnp.concatenate(
        [_argmax_ch(logits_l), _argmax_ch(logits_r)], axis=0)   # (2, tile)


def init_params(key):
    k1, k2, k3, k4 = jax.random.split(key, 4)
    # Channel-major weights: wXt has shape (out_ch, in_ch), biases (out_ch, 1).
    w1t = jax.random.normal(k1, (HIDDEN, IN_CH), jnp.float32) * 0.1
    b1 = jax.random.normal(k2, (HIDDEN, 1), jnp.float32) * 0.01
    w2t = jax.random.normal(k3, (NUM_CLASSES, HIDDEN), jnp.float32) * 0.1
    b2 = jax.random.normal(k4, (NUM_CLASSES, 1), jnp.float32) * 0.01
    return w1t, b1, w2t, b2


def model_forward(img, params):
    B, C, H, W = img.shape
    assert C == IN_CH
    HW = H * W
    # Channel-major flatten: NCHW -> (B, C, H*W).  No transpose needed.
    x = img.reshape(B, C, HW).astype(jnp.float32)

    tile = min(TILE_PIX_MAX, _round_up(HW, LANE))
    HW_pad = _round_up(HW, tile)
    if HW_pad != HW:
        x = jnp.pad(x, ((0, 0), (0, 0), (0, HW_pad - HW)))

    w1t, b1, w2t, b2 = params
    n_pix_steps = HW_pad // tile

    logits, masks = pl.pallas_call(
        segm_kernel,
        out_shape=(
            jax.ShapeDtypeStruct((B, NUM_CLASSES, HW_pad), jnp.float32),
            jax.ShapeDtypeStruct((B, 2, HW_pad), jnp.int32),
        ),
        grid_spec=pltpu.PrefetchScalarGridSpec(
            num_scalar_prefetch=0,
            grid=(B, n_pix_steps),
            in_specs=[
                pl.BlockSpec((1, IN_CH, tile), lambda b, p: (b, 0, p)),
                pl.BlockSpec((HIDDEN, IN_CH), lambda b, p: (0, 0)),
                pl.BlockSpec((HIDDEN, 1), lambda b, p: (0, 0)),
                pl.BlockSpec((NUM_CLASSES, HIDDEN), lambda b, p: (0, 0)),
                pl.BlockSpec((NUM_CLASSES, 1), lambda b, p: (0, 0)),
            ],
            out_specs=[
                pl.BlockSpec((1, NUM_CLASSES, tile), lambda b, p: (b, 0, p)),
                pl.BlockSpec((1, 2, tile), lambda b, p: (b, 0, p)),
            ],
        ),
        compiler_params=pltpu.CompilerParams(
            dimension_semantics=("parallel", "parallel")),
    )(x, w1t, b1, w2t, b2)

    # Channel-major outputs reshape straight to PyTorch conventions (no
    # transpose): logits NCHW, masks (B, H, W).
    logits = logits[:, :, :HW].reshape(B, NUM_CLASSES, H, W)
    masks = masks[:, :, :HW].reshape(B, 2, H, W)
    return {
        "segm_dict": {
            "segm_mask_l": masks[:, 0],
            "segm_mask_r": masks[:, 1],
            "segm_logits": logits,
        }
    }


def _reference_forward(img, params):
    """Pure-JAX reference of the same synthetic head + map2labels."""
    w1t, b1, w2t, b2 = params
    B, C, H, W = img.shape
    x = img.reshape(B, C, H * W).astype(jnp.float32)
    h = jnp.maximum(jnp.einsum("hc,bcp->bhp", w1t, x) + b1[None], 0.0)
    logits = jnp.einsum("nh,bhp->bnp", w2t, h) + b2[None]
    logits_nchw = logits.reshape(B, NUM_CLASSES, H, W)
    mask_l = jnp.argmax(logits_nchw[:, :HALF], axis=1).astype(jnp.int32)
    mask_r = jnp.argmax(logits_nchw[:, HALF:], axis=1).astype(jnp.int32)
    return logits_nchw, mask_l, mask_r


if __name__ == "__main__":
    key = jax.random.PRNGKey(0)
    k_img, k_params = jax.random.split(key)
    img = jax.random.normal(k_img, (2, IN_CH, 16, 16), jnp.float32)
    params = init_params(k_params)

    out = model_forward(img, params)
    jax.block_until_ready(out)

    ref_logits, ref_l, ref_r = _reference_forward(img, params)
    sd = out["segm_dict"]
    assert sd["segm_logits"].shape == (2, NUM_CLASSES, 16, 16)
    assert sd["segm_mask_l"].shape == (2, 16, 16)
    assert sd["segm_mask_r"].shape == (2, 16, 16)
    assert jnp.allclose(sd["segm_logits"], ref_logits, atol=1e-4, rtol=1e-4)
    assert jnp.array_equal(sd["segm_mask_l"], ref_l)
    assert jnp.array_equal(sd["segm_mask_r"], ref_r)

    print("KERNEL_OK")
</pallas_src>

<mosaic_0001>
module attributes {stable_mosaic.version = 11 : i64} {
  func.func @segm_kernel(%arg0: i32, %arg1: i32, %arg2: memref<1x3x256xf32, #tpu.memory_space<vmem>>, %arg3: memref<32x3xf32, #tpu.memory_space<vmem>>, %arg4: memref<32x1xf32, #tpu.memory_space<vmem>>, %arg5: memref<34x32xf32, #tpu.memory_space<vmem>>, %arg6: memref<34x1xf32, #tpu.memory_space<vmem>>, %arg7: memref<1x34x256xf32, #tpu.memory_space<vmem>>, %arg8: memref<1x2x256xi32, #tpu.memory_space<vmem>>) attributes {dimension_semantics = [#tpu.dimension_semantics<parallel>, #tpu.dimension_semantics<parallel>], iteration_bounds = array<i64: 2, 1>, scalar_prefetch = 0 : i64, scratch_operands = 0 : i64, tpu.core_type = #tpu.core_type<tc>, window_params = [{transform_indices = @transform_0, window_bounds = array<i64: 1, 3, 256>}, {pipeline_mode = #tpu.pipeline_mode<synchronous>, transform_indices = @transform_1, window_bounds = array<i64: 32, 3>}, {pipeline_mode = #tpu.pipeline_mode<synchronous>, transform_indices = @transform_2, window_bounds = array<i64: 32, 1>}, {pipeline_mode = #tpu.pipeline_mode<synchronous>, transform_indices = @transform_3, window_bounds = array<i64: 34, 32>}, {pipeline_mode = #tpu.pipeline_mode<synchronous>, transform_indices = @transform_4, window_bounds = array<i64: 34, 1>}, {transform_indices = @transform_5, window_bounds = array<i64: 1, 34, 256>}, {transform_indices = @transform_6, window_bounds = array<i64: 1, 2, 256>}]} {
    %c0 = arith.constant 0 : index
    %c0_0 = arith.constant 0 : index
    %c0_1 = arith.constant 0 : index
    %0 = vector.load %arg2[%c0, %c0_0, %c0_1] : memref<1x3x256xf32, #tpu.memory_space<vmem>>, vector<1x3x256xf32>
    %1 = vector.shape_cast %0 : vector<1x3x256xf32> to vector<3x256xf32>
    %c0_2 = arith.constant 0 : index
    %c0_3 = arith.constant 0 : index
    %2 = vector.load %arg3[%c0_2, %c0_3] : memref<32x3xf32, #tpu.memory_space<vmem>>, vector<32x3xf32>
    %3 = vector.extract_strided_slice %2 {offsets = [0, 0], sizes = [32, 1], strides = [1, 1]} : vector<32x3xf32> to vector<32x1xf32>
    %4 = vector.extract_strided_slice %1 {offsets = [0, 0], sizes = [1, 256], strides = [1, 1]} : vector<3x256xf32> to vector<1x256xf32>
    %5 = vector.broadcast %3 : vector<32x1xf32> to vector<32x256xf32>
    %6 = vector.broadcast %4 : vector<1x256xf32> to vector<32x256xf32>
    %7 = arith.mulf %5, %6 : vector<32x256xf32>
    %c0_4 = arith.constant 0 : index
    %c0_5 = arith.constant 0 : index
    %8 = vector.load %arg4[%c0_4, %c0_5] : memref<32x1xf32, #tpu.memory_space<vmem>>, vector<32x1xf32>
    %9 = vector.broadcast %8 : vector<32x1xf32> to vector<32x256xf32>
    %10 = arith.addf %7, %9 : vector<32x256xf32>
    %11 = vector.extract_strided_slice %2 {offsets = [0, 1], sizes = [32, 1], strides = [1, 1]} : vector<32x3xf32> to vector<32x1xf32>
    %12 = vector.extract_strided_slice %1 {offsets = [1, 0], sizes = [1, 256], strides = [1, 1]} : vector<3x256xf32> to vector<1x256xf32>
    %13 = vector.broadcast %11 : vector<32x1xf32> to vector<32x256xf32>
    %14 = vector.broadcast %12 : vector<1x256xf32> to vector<32x256xf32>
    %15 = arith.mulf %13, %14 : vector<32x256xf32>
    %16 = arith.addf %10, %15 : vector<32x256xf32>
    %17 = vector.extract_strided_slice %2 {offsets = [0, 2], sizes = [32, 1], strides = [1, 1]} : vector<32x3xf32> to vector<32x1xf32>
    %18 = vector.extract_strided_slice %1 {offsets = [2, 0], sizes = [1, 256], strides = [1, 1]} : vector<3x256xf32> to vector<1x256xf32>
    %19 = vector.broadcast %17 : vector<32x1xf32> to vector<32x256xf32>
    %20 = vector.broadcast %18 : vector<1x256xf32> to vector<32x256xf32>
    %21 = arith.mulf %19, %20 : vector<32x256xf32>
    %22 = arith.addf %16, %21 : vector<32x256xf32>
    %cst = arith.constant 0.000000e+00 : f32
    %23 = vector.broadcast %cst : f32 to vector<32x256xf32>
    %24 = arith.maximumf %22, %23 : vector<32x256xf32>
    %c0_6 = arith.constant 0 : index
    %c0_7 = arith.constant 0 : index
    %25 = vector.load %arg5[%c0_6, %c0_7] : memref<34x32xf32, #tpu.memory_space<vmem>>, vector<34x32xf32>
    %cst_8 = arith.constant dense<0.000000e+00> : vector<34x256xf32>
    %26 = tpu.matmul %25, %24, %cst_8 {dimension_numbers = #tpu.dot_dimension_numbers<[1], [0], [0], [1], [0, 0, 1, 1], [], []>} : vector<34x32xf32>, vector<32x256xf32>, vector<34x256xf32> -> vector<34x256xf32>
    %c0_9 = arith.constant 0 : index
    %c0_10 = arith.constant 0 : index
    %27 = vector.load %arg6[%c0_9, %c0_10] : memref<34x1xf32, #tpu.memory_space<vmem>>, vector<34x1xf32>
    %28 = vector.broadcast %27 : vector<34x1xf32> to vector<34x256xf32>
    %29 = arith.addf %26, %28 : vector<34x256xf32>
    %c0_11 = arith.constant 0 : index
    %c0_12 = arith.constant 0 : index
    %c0_13 = arith.constant 0 : index
    %30 = vector.load %arg7[%c0_11, %c0_12, %c0_13] : memref<1x34x256xf32, #tpu.memory_space<vmem>>, vector<1x34x256xf32>
    %31 = vector.shape_cast %30 : vector<1x34x256xf32> to vector<34x256xf32>
    %32 = vector.shape_cast %29 : vector<34x256xf32> to vector<1x34x256xf32>
    tpu.vector_store %arg7[%c0_11, %c0_12, %c0_13], %32 {strides = array<i32>} : memref<1x34x256xf32, #tpu.memory_space<vmem>>, vector<1x34x256xf32>,
    %33 = vector.extract_strided_slice %29 {offsets = [0, 0], sizes = [17, 256], strides = [1, 1]} : vector<34x256xf32> to vector<17x256xf32>
    %34 = vector.extract_strided_slice %29 {offsets = [17, 0], sizes = [17, 256], strides = [1, 1]} : vector<34x256xf32> to vector<17x256xf32>
    %35 = tpu.iota {dimensions = array<i32: 0>} : vector<17x256xi32>
    %cst_14 = arith.constant dense<0xFF800000> : vector<256xf32>
    %36 = vector.multi_reduction <maximumf>, %33, %cst_14 [0] : vector<17x256xf32> to vector<256xf32>
    %37 = vector.shape_cast %36 : vector<256xf32> to vector<1x256xf32>
    %38 = vector.broadcast %37 : vector<1x256xf32> to vector<17x256xf32>
    %39 = arith.cmpf oeq, %33, %38 : vector<17x256xf32>
    %c17_i32 = arith.constant 17 : i32
    %40 = vector.broadcast %c17_i32 : i32 to vector<17x256xi32>
    %41 = arith.select %39, %35, %40 : vector<17x256xi1>, vector<17x256xi32>
    %cst_15 = arith.constant dense<2147483647> : vector<256xi32>
    %42 = vector.multi_reduction <minsi>, %41, %cst_15 [0] : vector<17x256xi32> to vector<256xi32>
    %43 = vector.shape_cast %42 : vector<256xi32> to vector<1x256xi32>
    %cst_16 = arith.constant dense<0xFF800000> : vector<256xf32>
    %44 = vector.multi_reduction <maximumf>, %34, %cst_16 [0] : vector<17x256xf32> to vector<256xf32>
    %45 = vector.shape_cast %44 : vector<256xf32> to vector<1x256xf32>
    %46 = vector.broadcast %45 : vector<1x256xf32> to vector<17x256xf32>
    %47 = arith.cmpf oeq, %34, %46 : vector<17x256xf32>
    %c17_i32_17 = arith.constant 17 : i32
    %48 = vector.broadcast %c17_i32_17 : i32 to vector<17x256xi32>
    %49 = arith.select %47, %35, %48 : vector<17x256xi1>, vector<17x256xi32>
    %cst_18 = arith.constant dense<2147483647> : vector<256xi32>
    %50 = vector.multi_reduction <minsi>, %49, %cst_18 [0] : vector<17x256xi32> to vector<256xi32>
    %51 = vector.shape_cast %50 : vector<256xi32> to vector<1x256xi32>
    %52 = tpu.concatenate %43, %51 in 0 : vector<1x256xi32>, vector<1x256xi32> -> vector<2x256xi32>
    %c0_19 = arith.constant 0 : index
    %c0_20 = arith.constant 0 : index
    %c0_21 = arith.constant 0 : index
    %53 = vector.load %arg8[%c0_19, %c0_20, %c0_21] : memref<1x2x256xi32, #tpu.memory_space<vmem>>, vector<1x2x256xi32>
    %54 = vector.shape_cast %53 : vector<1x2x256xi32> to vector<2x256xi32>
    %55 = vector.shape_cast %52 : vector<2x256xi32> to vector<1x2x256xi32>
    tpu.vector_store %arg8[%c0_19, %c0_20, %c0_21], %55 {strides = array<i32>} : memref<1x2x256xi32, #tpu.memory_space<vmem>>, vector<1x2x256xi32>,
    return
  }
  func.func @transform_0(%arg0: i32, %arg1: i32) -> (i32, i32, i32) {
    %c0_i32 = arith.constant 0 : i32
    %c0_i32_0 = arith.constant 0 : i32
    return %arg0, %c0_i32, %arg1 : i32, i32, i32
  }
  func.func @transform_1(%arg0: i32, %arg1: i32) -> (i32, i32) {
    %c0_i32 = arith.constant 0 : i32
    %c0_i32_0 = arith.constant 0 : i32
    %c0_i32_1 = arith.constant 0 : i32
    return %c0_i32, %c0_i32_0 : i32, i32
  }
  func.func @transform_2(%arg0: i32, %arg1: i32) -> (i32, i32) {
    %c0_i32 = arith.constant 0 : i32
    %c0_i32_0 = arith.constant 0 : i32
    %c0_i32_1 = arith.constant 0 : i32
    return %c0_i32, %c0_i32_0 : i32, i32
  }
  func.func @transform_3(%arg0: i32, %arg1: i32) -> (i32, i32) {
    %c0_i32 = arith.constant 0 : i32
    %c0_i32_0 = arith.constant 0 : i32
    %c0_i32_1 = arith.constant 0 : i32
    return %c0_i32, %c0_i32_0 : i32, i32
  }
  func.func @transform_4(%arg0: i32, %arg1: i32) -> (i32, i32) {
    %c0_i32 = arith.constant 0 : i32
    %c0_i32_0 = arith.constant 0 : i32
    %c0_i32_1 = arith.constant 0 : i32
    return %c0_i32, %c0_i32_0 : i32, i32
  }
  func.func @transform_5(%arg0: i32, %arg1: i32) -> (i32, i32, i32) {
    %c0_i32 = arith.constant 0 : i32
    %c0_i32_0 = arith.constant 0 : i32
    return %arg0, %c0_i32, %arg1 : i32, i32, i32
  }
  func.func @transform_6(%arg0: i32, %arg1: i32) -> (i32, i32, i32) {
    %c0_i32 = arith.constant 0 : i32
    %c0_i32_0 = arith.constant 0 : i32
    return %arg0, %c0_i32, %arg1 : i32, i32, i32
  }
}

</mosaic_0001>

<llo_original>
// kernel: tpu_custom_call.1
$region0: #{tpu_custom_call.1}
  #allocation0 [shape = 'u32[]', space=smem, size = 0x4, offset = 0x4, fixed_abs, tag = 'smem constant byte address 0x4 - core index']
  #allocation1 [shape = 'u32[144,128]{1,0:T(1,128)}', space=vmem, size = 0x12000, scoped, tag = 'internal scratch']
  %s0 = inlined_call_operand.vmem [shape: f32[2,3,256], index: 0, kind: input, shape index: {}]
  %s1 = inlined_call_operand.vmem [shape: f32[32,3], index: 1, kind: input, shape index: {}]
  %s2 = inlined_call_operand.vmem [shape: f32[32,1], index: 2, kind: input, shape index: {}]
  %s3 = inlined_call_operand.vmem [shape: f32[34,32], index: 3, kind: input, shape index: {}]
  %s4 = inlined_call_operand.vmem [shape: f32[34,1], index: 4, kind: input, shape index: {}]
  %s5 = inlined_call_operand.vmem [shape: f32[2,34,256], index: 5, kind: output, shape index: {0}]
  %s6 = inlined_call_operand.hbm [shape: s32[2,2,256], index: 6, kind: output, shape index: {1}]
  %7 = xla_tuple %s5, %s6
  %s8 = sld [smem:[#allocation0]]
  $region61: #{tpu_custom_call.1} parent=0
    _
  %s10 = ssub.s32 1, %s8
  %s11 = scalar_select 0, %s10, %s8
  $region1: #{tpu_custom_call.1} parent=0
    #allocation2 [shape = 'u8[4096]{0}', space=vmem, size = 0x1000, scoped, tag = 'output window, operand 1']
    #allocation3 [shape = 's32[2]{0}', space=sflag, size = 0x8, scoped, tag = 'scoped memory for tpu_custom_call.1']
    %12 = vsyncpa [#allocation3], 0
    %s13 = scalar_lea.sflag [#allocation3], 1
    %14 = vsyncpa %s13, 0
    loop: start=0, step=1, limit=4
    $region2: #{tpu_custom_call.1} parent=1 // loop_pre_header
      _
    $region3: #{tpu_custom_call.1} parent=1 // loop_header
      %s16 = sphi 0, %s20
      %p17 = scmp.ge.s32.totalorder %s16, 4
      %s23 = sphi 0, %s35
      %s24 = sphi 0, %s31
      %s25 = sphi 0, %s23
      %s26 = sphi 0, %s24
      %s27 = sphi 0, %s25
      %s28 = sphi 0, %s26
      %s40 = sphi 0, %s42
      %s43 = sphi 0, %s40
      %s44 = sphi 0, %s43
      %s60 = sphi 0, %s44
      %s64 = sphi 0, %s64
      %s66 = sphi 0, %s64
      %s67 = sphi 0, %s66
      %s81 = sphi 0, %s67
      %s85 = sphi 0, %s85
      %s87 = sphi 0, %s85
      %s88 = sphi 0, %s87
      %s102 = sphi 0, %s88
      %s106 = sphi 0, %s106
      %s108 = sphi 0, %s106
      %s109 = sphi 0, %s108
      %s123 = sphi 0, %s109
      %s127 = sphi 0, %s127
      %s129 = sphi 0, %s127
      %s130 = sphi 0, %s129
      %s144 = sphi 0, %s130
      %s152 = sphi 0, %s154
      %s155 = sphi 0, %s152
      %s156 = sphi 0, %s155
      %s172 = sphi 0, %s156
      %s180 = sphi 0, %s182
      %s183 = sphi 0, %s180
      %s184 = sphi 0, %s183
      %s200 = sphi 0, %s184
    $region4: #{tpu_custom_call.1} parent=1 // loop_header_branch
      %19 = sbr.rel (%p17) target = $region8
    $region5: #{tpu_custom_call.1} parent=1 // loop_body
      %s21 = ssub.s32 %s16, 1
      %s22 = ssub.s32 %s16, 2
      %s29 = sadd.s32 1, %s24
      %p30 = scmp.ge.s32.totalorder %s29, 1
      %s31 = scalar_select %p30, 0, %s29
      %s32 = sadd.s32 1, %s23
      %s33 = scalar_select %p30, %s32, %s23
      %p34 = scmp.ge.s32.totalorder %s33, 2
      %s35 = scalar_select %p34, 0, %s33
      %s36 = ssub.s32 %s23, %s35
      %s37 = ssub.s32 %s24, %s31
      %s38 = sor.u32 %s36, %s37
      %p39 = scmp.eq.s32.totalorder %s38, 0
      %s41 = sadd.s32 %s40, 1
      %s42 = scalar_select %p39, %s40, %s41
      %p45 = pneg %p39
      %p46 = scmp.eq.s32.totalorder %s16, 1
      %p47 = por %p45, %p46
      %p48 = scmp.ne.s32.totalorder %s40, %s43
      %p49 = scmp.eq.s32.totalorder %s16, 0
      %p50 = por %p48, %p49
      %p51 = scmp.ne.s32.totalorder %s40, %s43
      %p52 = scmp.eq.s32.totalorder %s21, 1
      %p53 = por %p51, %p52
      %p54 = scmp.ne.s32.totalorder %s43, %s44
      %p55 = scmp.eq.s32.totalorder %s21, 0
      %p56 = por %p54, %p55
      %p57 = scmp.ne.s32.totalorder %s43, %s44
      %p58 = scmp.eq.s32.totalorder %s22, 1
      %p59 = por %p57, %p58
      %p61 = scmp.ne.s32.totalorder %s44, %s60
      %p62 = scmp.eq.s32.totalorder %s22, 0
      %p63 = por %p61, %p62
      %s65 = sadd.s32 %s64, 1
      %p68 = scmp.eq.s32.totalorder %s16, 1
      %p69 = scmp.ne.s32.totalorder %s64, %s66
      %p70 = scmp.eq.s32.totalorder %s16, 0
      %p71 = por %p69, %p70
      %p72 = scmp.ne.s32.totalorder %s64, %s66
      %p73 = scmp.eq.s32.totalorder %s21, 1
      %p74 = por %p72, %p73
      %p75 = scmp.ne.s32.totalorder %s66, %s67
      %p76 = scmp.eq.s32.totalorder %s21, 0
      %p77 = por %p75, %p76
      %p78 = scmp.ne.s32.totalorder %s66, %s67
      %p79 = scmp.eq.s32.totalorder %s22, 1
      %p80 = por %p78, %p79
      %p82 = scmp.ne.s32.totalorder %s67, %s81
      %p83 = scmp.eq.s32.totalorder %s22, 0
      %p84 = por %p82, %p83
      %s86 = sadd.s32 %s85, 1
      %p89 = scmp.eq.s32.totalorder %s16, 1
      %p90 = scmp.ne.s32.totalorder %s85, %s87
      %p91 = scmp.eq.s32.totalorder %s16, 0
      %p92 = por %p90, %p91
      %p93 = scmp.ne.s32.totalorder %s85, %s87
      %p94 = scmp.eq.s32.totalorder %s21, 1
      %p95 = por %p93, %p94
      %p96 = scmp.ne.s32.totalorder %s87, %s88
      %p97 = scmp.eq.s32.totalorder %s21, 0
      %p98 = por %p96, %p97
      %p99 = scmp.ne.s32.totalorder %s87, %s88
      %p100 = scmp.eq.s32.totalorder %s22, 1
      %p101 = por %p99, %p100
      %p103 = scmp.ne.s32.totalorder %s88, %s102
      %p104 = scmp.eq.s32.totalorder %s22, 0
      %p105 = por %p103, %p104
      %s107 = sadd.s32 %s106, 1
      %p110 = scmp.eq.s32.totalorder %s16, 1
      %p111 = scmp.ne.s32.totalorder %s106, %s108
      %p112 = scmp.eq.s32.totalorder %s16, 0
      %p113 = por %p111, %p112
      %p114 = scmp.ne.s32.totalorder %s106, %s108
      %p115 = scmp.eq.s32.totalorder %s21, 1
      %p116 = por %p114, %p115
      %p117 = scmp.ne.s32.totalorder %s108, %s109
      %p118 = scmp.eq.s32.totalorder %s21, 0
      %p119 = por %p117, %p118
      %p120 = scmp.ne.s32.totalorder %s108, %s109
      %p121 = scmp.eq.s32.totalorder %s22, 1
      %p122 = por %p120, %p121
      %p124 = scmp.ne.s32.totalorder %s109, %s123
      %p125 = scmp.eq.s32.totalorder %s22, 0
      %p126 = por %p124, %p125
      %s128 = sadd.s32 %s127, 1
      %p131 = scmp.eq.s32.totalorder %s16, 1
      %p132 = scmp.ne.s32.totalorder %s127, %s129
      %p133 = scmp.eq.s32.totalorder %s16, 0
      %p134 = por %p132, %p133
      %p135 = scmp.ne.s32.totalorder %s127, %s129
      %p136 = scmp.eq.s32.totalorder %s21, 1
      %p137 = por %p135, %p136
      %p138 = scmp.ne.s32.totalorder %s129, %s130
      %p139 = scmp.eq.s32.totalorder %s21, 0
      %p140 = por %p138, %p139
      %p141 = scmp.ne.s32.totalorder %s129, %s130
      %p142 = scmp.eq.s32.totalorder %s22, 1
      %p143 = por %p141, %p142
      %p145 = scmp.ne.s32.totalorder %s130, %s144
      %p146 = scmp.eq.s32.totalorder %s22, 0
      %p147 = por %p145, %p146
      %s148 = ssub.s32 %s23, %s35
      %s149 = ssub.s32 %s24, %s31
      %s150 = sor.u32 %s148, %s149
      %p151 = scmp.eq.s32.totalorder %s150, 0
      %s153 = sadd.s32 %s152, 1
      %s154 = scalar_select %p151, %s152, %s153
      %p157 = pneg %p151
      %p158 = scmp.eq.s32.totalorder %s16, 1
      %p159 = por %p157, %p158
      %p160 = scmp.ne.s32.totalorder %s152, %s155
      %p161 = scmp.eq.s32.totalorder %s16, 0
      %p162 = por %p160, %p161
      %p163 = scmp.ne.s32.totalorder %s152, %s155
      %p164 = scmp.eq.s32.totalorder %s21, 1
      %p165 = por %p163, %p164
      %p166 = scmp.ne.s32.totalorder %s155, %s156
      %p167 = scmp.eq.s32.totalorder %s21, 0
      %p168 = por %p166, %p167
      %p169 = scmp.ne.s32.totalorder %s155, %s156
      %p170 = scmp.eq.s32.totalorder %s22, 1
      %p171 = por %p169, %p170
      %p173 = scmp.ne.s32.totalorder %s156, %s172
      %p174 = scmp.eq.s32.totalorder %s22, 0
      %p175 = por %p173, %p174
      %s176 = ssub.s32 %s23, %s35
      %s177 = ssub.s32 %s24, %s31
      %s178 = sor.u32 %s176, %s177
      %p179 = scmp.eq.s32.totalorder %s178, 0
      %s181 = sadd.s32 %s180, 1
      %s182 = scalar_select %p179, %s180, %s181
      %p185 = pneg %p179
      %p186 = scmp.eq.s32.totalorder %s16, 1
      %p187 = por %p185, %p186
      %p188 = scmp.ne.s32.totalorder %s180, %s183
      %p189 = scmp.eq.s32.totalorder %s16, 0
      %p190 = por %p188, %p189
      %p191 = scmp.ne.s32.totalorder %s180, %s183
      %p192 = scmp.eq.s32.totalorder %s21, 1
      %p193 = por %p191, %p192
      %p194 = scmp.ne.s32.totalorder %s183, %s184
      %p195 = scmp.eq.s32.totalorder %s21, 0
      %p196 = por %p194, %p195
      %p197 = scmp.ne.s32.totalorder %s183, %s184
      %p198 = scmp.eq.s32.totalorder %s22, 1
      %p199 = por %p197, %p198
      %p201 = scmp.ne.s32.totalorder %s184, %s200
      %p202 = scmp.eq.s32.totalorder %s22, 0
      %p203 = por %p201, %p202
      %p204 = scmp.le.s32.totalorder 1, %s16
      %p205 = scmp.lt.s32.totalorder %s16, 3
      %p206 = pnand %p204, %p205
      %p207 = pneg %p206
      // Predicated region
      $region9: #{tpu_custom_call.1} parent=5 // pred_check
        _
      $region10: #{tpu_custom_call.1} parent=5 // pred_check_branch
        %209 = sbr.rel (%p206) target = $region12
      $region11: #{tpu_custom_call.1} parent=5 // pred_region
        %s210 = ssub.s32 %s16, 1
        // Predicated region
        $region13: #{tpu_custom_call.1} parent=11 // pred_check
          %p211 = pneg %p77
        $region14: #{tpu_custom_call.1} parent=11 // pred_check_branch
          %213 = sbr.rel (%p211) target = $region16
        $region15: #{tpu_custom_call.1} parent=11 // pred_region
          _
        $region16: #{tpu_custom_call.1} parent=11 // pred_fallthru
          _
        // Predicated region
        $region17: #{tpu_custom_call.1} parent=11 // pred_check
          %p214 = pneg %p98
        $region18: #{tpu_custom_call.1} parent=11 // pred_check_branch
          %216 = sbr.rel (%p214) target = $region20
        $region19: #{tpu_custom_call.1} parent=11 // pred_region
          _
        $region20: #{tpu_custom_call.1} parent=11 // pred_fallthru
          _
        // Predicated region
        $region21: #{tpu_custom_call.1} parent=11 // pred_check
          %p217 = pneg %p119
        $region22: #{tpu_custom_call.1} parent=11 // pred_check_branch
          %219 = sbr.rel (%p217) target = $region24
        $region23: #{tpu_custom_call.1} parent=11 // pred_region
          _
        $region24: #{tpu_custom_call.1} parent=11 // pred_fallthru
          _
        // Predicated region
        $region25: #{tpu_custom_call.1} parent=11 // pred_check
          %p220 = pneg %p140
        $region26: #{tpu_custom_call.1} parent=11 // pred_check_branch
          %222 = sbr.rel (%p220) target = $region28
        $region27: #{tpu_custom_call.1} parent=11 // pred_region
          _
        $region28: #{tpu_custom_call.1} parent=11 // pred_fallthru
          _
      $region12: #{tpu_custom_call.1} parent=5 // pred_fallthru
        _
      %p223 = scmp.lt.s32.totalorder %s16, 2
      // Predicated region
      $region29: #{tpu_custom_call.1} parent=5 // pred_check
        %p224 = pneg %p223
      $region30: #{tpu_custom_call.1} parent=5 // pred_check_branch
        %226 = sbr.rel (%p224) target = $region32
      $region31: #{tpu_custom_call.1} parent=5 // pred_region
        // Predicated region
        $region33: #{tpu_custom_call.1} parent=31 // pred_check
          %p227 = pneg %p50
        $region34: #{tpu_custom_call.1} parent=31 // pred_check_branch
          %229 = sbr.rel (%p227) target = $region36
        $region35: #{tpu_custom_call.1} parent=31 // pred_region
          %s230 = smul.u32 2, %s24
          %p231 = scmp.lt.s32.totalorder %s23, 1
          %s232 = scalar_select %p231, %s23, 1
          %p233 = scmp.lt.s32.totalorder %s230, 1
          %s234 = scalar_select %p233, %s230, 1
          %s235 = smul.addr %s232, 2
          %s236 = sadd.s32 %s234, %s235
          %s237 = smul.addr %s236, 4
          %s238 = scalar_lea.vmem %s0, %s237
          %s239 = smul.u32 2, %s24
        $region36: #{tpu_custom_call.1} parent=31 // pred_fallthru
          _
      $region32: #{tpu_custom_call.1} parent=5 // pred_fallthru
        _
      %p240 = scmp.le.s32.totalorder 1, %s16
      %p241 = scmp.lt.s32.totalorder %s16, 3
      %p242 = pnand %p240, %p241
      %p243 = pneg %p242
      // Predicated region
      $region37: #{tpu_custom_call.1} parent=5 // pred_check
        _
      $region38: #{tpu_custom_call.1} parent=5 // pred_check_branch
        %245 = sbr.rel (%p242) target = $region40
      $region39: #{tpu_custom_call.1} parent=5 // pred_region
        %s246 = ssub.s32 %s16, 1
        %s247 = smul.u32 2, %s26
        %p248 = scmp.lt.s32.totalorder %s25, 1
        %s249 = scalar_select %p248, %s25, 1
        %p250 = scmp.lt.s32.totalorder %s247, 1
        %s251 = scalar_select %p250, %s247, 1
        %s252 = smul.addr %s249, 2
        %s253 = sadd.s32 %s251, %s252
        %s254 = smul.addr %s253, 4
        %s255 = scalar_lea.vmem %s0, %s254
        %p256 = pneg %p56
        %p257 = pneg %p53
        %p258 = pneg %p77
        %p259 = pneg %p74
        %p260 = pneg %p98
        %p261 = pneg %p95
        %p262 = pneg %p119
        %p263 = pneg %p116
        %p264 = pneg %p140
        %p265 = pneg %p137
        %p266 = pneg %p168
        %p267 = pneg %p165
        %s268 = smul.u32 2, %s26
        %p269 = scmp.lt.s32.totalorder %s25, 1
        %s270 = scalar_select %p269, %s25, 1
        %p271 = scmp.lt.s32.totalorder %s268, 1
        %s272 = scalar_select %p271, %s268, 1
        %s273 = smul.addr %s270, 10
        %s274 = sadd.s32 %s272, %s273
        %s275 = smul.addr %s274, 8
        %s276 = scalar_lea.vmem %s5, %s275
        %p277 = pneg %p196
        %p278 = pneg %p193
        %s279 = sand.u32 %s183, 1
        %s280 = scalar_lea.sflag [#allocation3], %s279
        %s281 = sand.u32 %s183, 1
        %s282 = smul.addr %s281, 4
        %s283 = scalar_lea.vmem [#allocation2], %s282
        %s284 = smul.u32 2, %s26
        %p285 = scmp.lt.s32.totalorder %s25, 1
        %s286 = scalar_select %p285, %s25, 1
        %p287 = scmp.lt.s32.totalorder %s284, 1
        %s288 = scalar_select %p287, %s284, 1
        %s289 = smul.addr %s286, 2
        %s290 = sadd.s32 %s288, %s289
        %s291 = smul.addr %s290, 4
        %s292 = scalar_lea.vmem %s0, %s291
        %s293 = smul.u32 2, %s26
        %s294 = smul.u32 2, %s26
        %p295 = scmp.lt.s32.totalorder %s25, 1
        %s296 = scalar_select %p295, %s25, 1
        %p297 = scmp.lt.s32.totalorder %s294, 1
        %s298 = scalar_select %p297, %s294, 1
        %s299 = smul.addr %s296, 10
        %s300 = sadd.s32 %s298, %s299
        %s301 = smul.addr %s300, 8
        %s302 = scalar_lea.vmem %s5, %s301
        %s303 = smul.u32 2, %s26
        %s304 = smul.u32 2, %s26
        %v305 = vld [vmem:[%s292] sm:$0x77]
        %v306 = vld [vmem:[%s1] sm:$0xff]
        %v307 = vld [vmem:[%s1 + $0x8] sm:$0xff]
        %v308 = vld [vmem:[%s1 + $0x10] sm:$0xff]
        %v309 = vld [vmem:[%s1 + $0x18] sm:$0xff]
        %311 = vset.pattern.permute.xlu0 0
        %312 = vperm.xlu0 %311, %v306
        %v313 = vpop.permute.xlu0 %312
        %316 = vset.pattern.permute.xlu0 0
        %317 = vperm.xlu0 %316, %v307
        %v318 = vpop.permute.xlu0 %317
        %321 = vset.pattern.permute.xlu0 0
        %322 = vperm.xlu0 %321, %v308
        %v323 = vpop.permute.xlu0 %322
        %326 = vset.pattern.permute.xlu0 0
        %327 = vperm.xlu0 %326, %v309
        %v328 = vpop.permute.xlu0 %327
        %v331 = vlaneseq
        %v332 = vshrl.u32 %v331, 7
        %v333 = vsub.s32 0, %v332
        %v334 = vrot.slane %v305, %v333
        %v335 = vlaneseq
        %v336 = vshrl.u32 %v335, 7
        %v337 = vsub.s32 4, %v336
        %v338 = vrot.slane %v305, %v337
        %v341 = vlaneseq
        %v342 = vshrl.u32 %v341, 7
        %v343 = vsub.s32 0, %v342
        %v344 = vrot.slane %v334, %v343
        %v345 = vlaneseq
        %v346 = vshrl.u32 %v345, 7
        %v347 = vsub.s32 0, %v346
        %v348 = vrot.slane %v338, %v347
        %v349 = vmul.f32 %v313, %v344
        %v350 = vmul.f32 %v313, %v348
        %v351 = vmul.f32 %v318, %v344
        %v352 = vmul.f32 %v318, %v348
        %v353 = vmul.f32 %v323, %v344
        %v354 = vmul.f32 %v323, %v348
        %v355 = vmul.f32 %v328, %v344
        %v356 = vmul.f32 %v328, %v348
        %v357 = vld [vmem:[%s2] sm:$0xff]
        %v358 = vld [vmem:[%s2 + $0x8] sm:$0xff]
        %v359 = vld [vmem:[%s2 + $0x10] sm:$0xff]
        %v360 = vld [vmem:[%s2 + $0x18] sm:$0xff]
        %362 = vset.pattern.permute.xlu0 0
        %363 = vperm.xlu0 %362, %v357
        %v364 = vpop.permute.xlu0 %363
        %367 = vset.pattern.permute.xlu0 0
        %368 = vperm.xlu0 %367, %v358
        %v369 = vpop.permute.xlu0 %368
        %372 = vset.pattern.permute.xlu0 0
        %373 = vperm.xlu0 %372, %v359
        %v374 = vpop.permute.xlu0 %373
        %377 = vset.pattern.permute.xlu0 0
        %378 = vperm.xlu0 %377, %v360
        %v379 = vpop.permute.xlu0 %378
        %v381 = vadd.f32 %v349, %v364
        %v382 = vadd.f32 %v350, %v364
        %v383 = vadd.f32 %v351, %v369
        %v384 = vadd.f32 %v352, %v369
        %v385 = vadd.f32 %v353, %v374
        %v386 = vadd.f32 %v354, %v374
        %v387 = vadd.f32 %v355, %v379
        %v388 = vadd.f32 %v356, %v379
        %389 = vset.pattern.permute.xlu0 1
        %390 = vperm.xlu0 %389, %v306
        %v391 = vpop.permute.xlu0 %390
        %393 = vset.pattern.permute.xlu0 1
        %394 = vperm.xlu0 %393, %v307
        %v395 = vpop.permute.xlu0 %394
        %397 = vset.pattern.permute.xlu0 1
        %398 = vperm.xlu0 %397, %v308
        %v399 = vpop.permute.xlu0 %398
        %401 = vset.pattern.permute.xlu0 1
        %402 = vperm.xlu0 %401, %v309
        %v403 = vpop.permute.xlu0 %402
        %v405 = vlaneseq
        %v406 = vshrl.u32 %v405, 7
        %v407 = vsub.s32 1, %v406
        %v408 = vrot.slane %v305, %v407
        %v409 = vlaneseq
        %v410 = vshrl.u32 %v409, 7
        %v411 = vsub.s32 5, %v410
        %v412 = vrot.slane %v305, %v411
        %v415 = vlaneseq
        %v416 = vshrl.u32 %v415, 7
        %v417 = vsub.s32 1, %v416
        %v418 = vrot.slane %v408, %v417
        %v419 = vlaneseq
        %v420 = vshrl.u32 %v419, 7
        %v421 = vsub.s32 1, %v420
        %v422 = vrot.slane %v412, %v421
        %v423 = vmul.f32 %v391, %v418
        %v424 = vmul.f32 %v391, %v422
        %v425 = vmul.f32 %v395, %v418
        %v426 = vmul.f32 %v395, %v422
        %v427 = vmul.f32 %v399, %v418
        %v428 = vmul.f32 %v399, %v422
        %v429 = vmul.f32 %v403, %v418
        %v430 = vmul.f32 %v403, %v422
        %v431 = vadd.f32 %v381, %v423
        %v432 = vadd.f32 %v382, %v424
        %v433 = vadd.f32 %v383, %v425
        %v434 = vadd.f32 %v384, %v426
        %v435 = vadd.f32 %v385, %v427
        %v436 = vadd.f32 %v386, %v428
        %v437 = vadd.f32 %v387, %v429
        %v438 = vadd.f32 %v388, %v430
        %439 = vset.pattern.permute.xlu0 2
        %440 = vperm.xlu0 %439, %v306
        %v441 = vpop.permute.xlu0 %440
        %443 = vset.pattern.permute.xlu0 2
        %444 = vperm.xlu0 %443, %v307
        %v445 = vpop.permute.xlu0 %444
        %447 = vset.pattern.permute.xlu0 2
        %448 = vperm.xlu0 %447, %v308
        %v449 = vpop.permute.xlu0 %448
        %451 = vset.pattern.permute.xlu0 2
        %452 = vperm.xlu0 %451, %v309
        %v453 = vpop.permute.xlu0 %452
        %v455 = vlaneseq
        %v456 = vshrl.u32 %v455, 7
        %v457 = vsub.s32 2, %v456
        %v458 = vrot.slane %v305, %v457
        %v459 = vlaneseq
        %v460 = vshrl.u32 %v459, 7
        %v461 = vsub.s32 6, %v460
        %v462 = vrot.slane %v305, %v461
        %v465 = vlaneseq
        %v466 = vshrl.u32 %v465, 7
        %v467 = vsub.s32 2, %v466
        %v468 = vrot.slane %v458, %v467
        %v469 = vlaneseq
        %v470 = vshrl.u32 %v469, 7
        %v471 = vsub.s32 2, %v470
        %v472 = vrot.slane %v462, %v471
        %v473 = vmul.f32 %v441, %v468
        %v474 = vmul.f32 %v441, %v472
        %v475 = vmul.f32 %v445, %v468
        %v476 = vmul.f32 %v445, %v472
        %v477 = vmul.f32 %v449, %v468
        %v478 = vmul.f32 %v449, %v472
        %v479 = vmul.f32 %v453, %v468
        %v480 = vmul.f32 %v453, %v472
        %v481 = vadd.f32 %v431, %v473
        %v482 = vadd.f32 %v432, %v474
        %v483 = vadd.f32 %v433, %v475
        %v484 = vadd.f32 %v434, %v476
        %v485 = vadd.f32 %v435, %v477
        %v486 = vadd.f32 %v436, %v478
        %v487 = vadd.f32 %v437, %v479
        %v488 = vadd.f32 %v438, %v480
        %v489 = vmax.f32 %v481, 0.0
        %v490 = vmax.f32 %v482, 0.0
        %v491 = vmax.f32 %v483, 0.0
        %v492 = vmax.f32 %v484, 0.0
        %v493 = vmax.f32 %v485, 0.0
        %v494 = vmax.f32 %v486, 0.0
        %v495 = vmax.f32 %v487, 0.0
        %v496 = vmax.f32 %v488, 0.0
        %v497 = vld [vmem:[%s3] sm:$0xff]
        %v498 = vld [vmem:[%s3 + $0x8] sm:$0xff]
        %v499 = vld [vmem:[%s3 + $0x10] sm:$0xff]
        %v500 = vld [vmem:[%s3 + $0x18] sm:$0xff]
        %v501 = vld [vmem:[%s3 + $0x20] sm:$0x3]
        %v502 = vld [vmem:[%s4] sm:$0xff]
        %v503 = vld [vmem:[%s4 + $0x8] sm:$0xff]
        %v504 = vld [vmem:[%s4 + $0x10] sm:$0xff]
        %v505 = vld [vmem:[%s4 + $0x18] sm:$0xff]
        %v506 = vld [vmem:[%s4 + $0x20] sm:$0x3]
        %508 = vset.pattern.permute.xlu0 0
        %509 = vperm.xlu0 %508, %v502
        %v510 = vpop.permute.xlu0 %509
        %513 = vset.pattern.permute.xlu0 0
        %514 = vperm.xlu0 %513, %v503
        %v515 = vpop.permute.xlu0 %514
        %518 = vset.pattern.permute.xlu0 0
        %519 = vperm.xlu0 %518, %v504
        %v520 = vpop.permute.xlu0 %519
        %523 = vset.pattern.permute.xlu0 0
        %524 = vperm.xlu0 %523, %v505
        %v525 = vpop.permute.xlu0 %524
        %528 = vset.pattern.permute.xlu0 0
        %529 = vperm.xlu0 %528, %v506
        %v530 = vpop.permute.xlu0 %529
        %vm532 = vcmask 261120
        %v534 = vsel %vm532, %v497, 0
        %v537 = vsel %vm532, %v498, 0
        %v540 = vsel %vm532, %v499, 0
        %v543 = vsel %vm532, %v500, 0
        %v546 = vsel %vm532, %v501, 0
        %548 = vmatprep.subr.mxu0 %v490
        %549 = vmatpush1.msra.mxu0 %v489
        %550 = vmatprep.subr.mxu0 %v492
        %551 = vmatpush1.msra.mxu0 %v491
        %552 = vmatprep.subr.mxu0 %v494
        %553 = vmatpush1.msra.mxu0 %v493
        %554 = vmatprep.subr.mxu0 %v496
        %555 = vmatpush1.msra.mxu0 %v495
        %556 = vmatprep.subr.mxu0 0.0
        %557 = vmatpush1.msra.mxu0 0.0
        %558 = vmatprep.subr.mxu0 0.0
        %559 = vmatpush1.msra.mxu0 0.0
        %560 = vmatprep.subr.mxu0 0.0
        %561 = vmatpush1.msra.mxu0 0.0
        %562 = vmatprep.subr.mxu0 0.0
        %563 = vmatpush1.msra.mxu0 0.0
        %564 = vmatprep.subr.mxu0 0.0
        %565 = vmatpush1.msra.mxu0 0.0
        %566 = vmatprep.subr.mxu0 0.0
        %567 = vmatpush1.msra.mxu0 0.0
        %568 = vmatprep.subr.mxu0 0.0
        %569 = vmatpush1.msra.mxu0 0.0
        %570 = vmatprep.subr.mxu0 0.0
        %571 = vmatpush1.msra.mxu0 0.0
        %572 = vmatprep.subr.mxu0 0.0
        %573 = vmatpush1.msra.mxu0 0.0
        %574 = vmatprep.subr.mxu0 0.0
        %575 = vmatpush1.msra.mxu0 0.0
        %576 = vmatprep.subr.mxu0 0.0
        %577 = vmatpush1.msra.mxu0 0.0
        %578 = vmatprep.subr.mxu0 0.0
        %579 = vmatpush1.msra.mxu0 0.0
        %580 = vmatprep.subr.mxu0 0.0
        %581 = vmatpush1.msra.mxu0 0.0
        %582 = vmatprep.subr.mxu0 0.0
        %583 = vmatpush1.msra.mxu0 0.0
        %584 = vmatprep.subr.mxu0 0.0
        %585 = vmatpush1.msra.mxu0 0.0
        %586 = vmatprep.subr.mxu0 0.0
        %587 = vmatpush1.msra.mxu0 0.0
        %588 = vmatprep.subr.mxu0 0.0
        %589 = vmatpush1.msra.mxu0 0.0
        %590 = vmatprep.subr.mxu0 0.0
        %591 = vmatpush1.msra.mxu0 0.0
        %592 = vmatprep.subr.mxu0 0.0
        %593 = vmatpush1.msra.mxu0 0.0
        %594 = vmatprep.subr.mxu0 0.0
        %595 = vmatpush1.msra.mxu0 0.0
        %596 = vmatprep.subr.mxu0 0.0
        %597 = vmatpush1.msra.mxu0 0.0
        %598 = vmatprep.subr.mxu0 0.0
        %599 = vmatpush1.msra.mxu0 0.0
        %600 = vmatprep.subr.mxu0 0.0
        %601 = vmatpush1.msra.mxu0 0.0
        %602 = vmatprep.subr.mxu0 0.0
        %603 = vmatpush1.msra.mxu0 0.0
        %604 = vmatprep.subr.mxu0 0.0
        %605 = vmatpush1.msra.mxu0 0.0
        %606 = vmatprep.subr.mxu0 0.0
        %607 = vmatpush1.msra.mxu0 0.0
        %608 = vmatprep.subr.mxu0 0.0
        %609 = vmatpush1.msra.mxu0 0.0
        %610 = vmatprep.subr.mxu0 0.0
        %611 = vmatpush1.msra.mxu0 0.0
        %612 = vmatprep.mubr.f32.mxu0 0.0
        %613 = vmatmul.mubr.f32.gmra.mrb[0].mxu0 %v534
        %v614 = vpop.f32.mrb[0].mxu0
        %v615 = vadd.f32 %v510, %v614
        %v616 = vpop.f32.mrb[0].mxu0
        %v617 = vadd.f32 %v510, %v616
        %618 = vmatprep.mubr.f32.mxu0 0.0
        %619 = vmatmul.mubr.f32.gmra.mrb[0].mxu0 %v537
        %v620 = vpop.f32.mrb[0].mxu0
        %v621 = vadd.f32 %v515, %v620
        %v622 = vpop.f32.mrb[0].mxu0
        %v623 = vadd.f32 %v515, %v622
        %624 = vmatprep.mubr.f32.mxu0 0.0
        %625 = vmatmul.mubr.f32.gmra.mrb[0].mxu0 %v540
        %v626 = vpop.f32.mrb[0].mxu0
        %v627 = vadd.f32 %v520, %v626
        %v628 = vpop.f32.mrb[0].mxu0
        %v629 = vadd.f32 %v520, %v628
        %630 = vmatprep.mubr.f32.mxu0 0.0
        %631 = vmatmul.mubr.f32.gmra.mrb[0].mxu0 %v543
        %v632 = vpop.f32.mrb[0].mxu0
        %v633 = vadd.f32 %v525, %v632
        %v634 = vpop.f32.mrb[0].mxu0
        %v635 = vadd.f32 %v525, %v634
        %636 = vmatprep.mubr.f32.mxu0 0.0
        %637 = vmatmul.mubr.f32.gmra.mrb[0].mxu0 %v546
        %v638 = vpop.f32.mrb[0].mxu0
        %v639 = vadd.f32 %v530, %v638
        %v640 = vpop.f32.mrb[0].mxu0
        %v641 = vadd.f32 %v530, %v640
        %642 = vdwg.mxu0
        %643 = vst [vmem:[%s302] sm:$0xff] %v615
        %644 = vst [vmem:[%s302 + $0x8] sm:$0xff] %v617
        %645 = vst [vmem:[%s302 + $0x10] sm:$0xff] %v621
        %646 = vst [vmem:[%s302 + $0x18] sm:$0xff] %v623
        %647 = vst [vmem:[%s302 + $0x20] sm:$0xff] %v627
        %648 = vst [vmem:[%s302 + $0x28] sm:$0xff] %v629
        %649 = vst [vmem:[%s302 + $0x30] sm:$0xff] %v633
        %650 = vst [vmem:[%s302 + $0x38] sm:$0xff] %v635
        %651 = vst [vmem:[%s302 + $0x40] sm:$0x3] %v639
        %652 = vst [vmem:[%s302 + $0x48] sm:$0x3] %v641
        %v653 = vlaneseq
        %v654 = vshrl.u32 %v653, 7
        %v655 = vadd.s32 %v654, 8
        %v656 = vadd.s32 %v654, 16
        %vm657 = vcmask 1040384
        %v658 = vsel %vm657, %v627, -inf
        %v659 = vmax.f32 %v615, %v658
        %v660 = vmax.f32 %v659, %v621
        %v661 = vrot.slane %v660, 4
        %v662 = vmax.f32 %v660, %v661
        %v663 = vrot.slane %v662, 2
        %v664 = vmax.f32 %v662, %v663
        %v665 = vrot.slane %v664, 1
        %v666 = vmax.f32 %v664, %v665
        %v667 = vsel %vm657, %v629, -inf
        %v668 = vmax.f32 %v617, %v667
        %v669 = vmax.f32 %v668, %v623
        %v670 = vrot.slane %v669, 4
        %v671 = vmax.f32 %v669, %v670
        %v672 = vrot.slane %v671, 2
        %v673 = vmax.f32 %v671, %v672
        %v674 = vrot.slane %v673, 1
        %v675 = vmax.f32 %v673, %v674
        %vm676 = vcmp.eq.f32.partialorder %v615, %v666
        %vm677 = vcmp.eq.f32.partialorder %v617, %v675
        %vm678 = vcmp.eq.f32.partialorder %v621, %v666
        %vm679 = vcmp.eq.f32.partialorder %v623, %v675
        %vm680 = vcmp.eq.f32.partialorder %v627, %v666
        %vm681 = vcmp.eq.f32.partialorder %v629, %v675
        %v682 = vsel %vm676, %v654, 17
        %v683 = vsel %vm677, %v654, 17
        %v684 = vsel %vm678, %v655, 17
        %v685 = vsel %vm679, %v655, 17
        %v686 = vsel %vm680, %v656, 17
        %v687 = vsel %vm681, %v656, 17
        %v688 = vsel %vm657, %v686, 2147483647
        %vm689 = vcmp.lt.s32.totalorder %v682, %v688
        %v690 = vsel %vm689, %v682, %v688
        %vm691 = vcmp.lt.s32.totalorder %v690, %v684
        %v692 = vsel %vm691, %v690, %v684
        %v693 = vrot.slane %v692, 4
        %vm694 = vcmp.lt.s32.totalorder %v692, %v693
        %v695 = vsel %vm694, %v692, %v693
        %v696 = vrot.slane %v695, 2
        %vm697 = vcmp.lt.s32.totalorder %v695, %v696
        %v698 = vsel %vm697, %v695, %v696
        %v699 = vrot.slane %v698, 1
        %vm700 = vcmp.lt.s32.totalorder %v698, %v699
        %v701 = vsel %vm700, %v698, %v699
        %v702 = vsel %vm657, %v687, 2147483647
        %vm703 = vcmp.lt.s32.totalorder %v683, %v702
        %v704 = vsel %vm703, %v683, %v702
        %vm705 = vcmp.lt.s32.totalorder %v704, %v685
        %v706 = vsel %vm705, %v704, %v685
        %v707 = vrot.slane %v706, 4
        %vm708 = vcmp.lt.s32.totalorder %v706, %v707
        %v709 = vsel %vm708, %v706, %v707
        %v710 = vrot.slane %v709, 2
        %vm711 = vcmp.lt.s32.totalorder %v709, %v710
        %v712 = vsel %vm711, %v709, %v710
        %v713 = vrot.slane %v712, 1
        %vm714 = vcmp.lt.s32.totalorder %v712, %v713
        %v715 = vsel %vm714, %v712, %v713
        %vm716 = vcmask 1047553
        %v717 = vsel %vm716, %v627, -inf
        %vm718 = vcmask 1041408
        %v719 = vsel %vm718, %v639, -inf
        %v720 = vmax.f32 %v717, %v719
        %v721 = vmax.f32 %v720, %v633
        %v722 = vrot.slane %v721, 4
        %v723 = vmax.f32 %v721, %v722
        %v724 = vrot.slane %v723, 2
        %v725 = vmax.f32 %v723, %v724
        %v726 = vrot.slane %v725, 1
        %v727 = vmax.f32 %v725, %v726
        %v728 = vsel %vm716, %v629, -inf
        %v729 = vsel %vm718, %v641, -inf
        %v730 = vmax.f32 %v728, %v729
        %v731 = vmax.f32 %v730, %v635
        %v732 = vrot.slane %v731, 4
        %v733 = vmax.f32 %v731, %v732
        %v734 = vrot.slane %v733, 2
        %v735 = vmax.f32 %v733, %v734
        %v736 = vrot.slane %v735, 1
        %v737 = vmax.f32 %v735, %v736
        %vm738 = vcmp.eq.f32.partialorder %v627, %v727
        %vm739 = vcmp.eq.f32.partialorder %v629, %v737
        %vm740 = vcmp.eq.f32.partialorder %v633, %v727
        %vm741 = vcmp.eq.f32.partialorder %v635, %v737
        %vm742 = vcmp.eq.f32.partialorder %v639, %v727
        %vm743 = vcmp.eq.f32.partialorder %v641, %v737
        %v744 = vrot.slane %v654, 7
        %v745 = vrot.slane %v655, 7
        %v746 = vsel %vm657, %v744, %v745
        %v747 = vrot.slane %v656, 7
        %v748 = vsel %vm657, %v745, %v747
        %v749 = vsel %vm738, %v744, 17
        %v750 = vsel %vm739, %v744, 17
        %v751 = vsel %vm740, %v746, 17
        %v752 = vsel %vm741, %v746, 17
        %v753 = vsel %vm742, %v748, 17
        %v754 = vsel %vm743, %v748, 17
        %v755 = vsel %vm716, %v749, 2147483647
        %v756 = vsel %vm718, %v753, 2147483647
        %vm757 = vcmp.lt.s32.totalorder %v755, %v756
        %v758 = vsel %vm757, %v755, %v756
        %vm759 = vcmp.lt.s32.totalorder %v758, %v751
        %v760 = vsel %vm759, %v758, %v751
        %v761 = vrot.slane %v760, 4
        %vm762 = vcmp.lt.s32.totalorder %v760, %v761
        %v763 = vsel %vm762, %v760, %v761
        %v764 = vrot.slane %v763, 2
        %vm765 = vcmp.lt.s32.totalorder %v763, %v764
        %v766 = vsel %vm765, %v763, %v764
        %v767 = vrot.slane %v766, 1
        %vm768 = vcmp.lt.s32.totalorder %v766, %v767
        %v769 = vsel %vm768, %v766, %v767
        %v770 = vsel %vm716, %v750, 2147483647
        %v771 = vsel %vm718, %v754, 2147483647
        %vm772 = vcmp.lt.s32.totalorder %v770, %v771
        %v773 = vsel %vm772, %v770, %v771
        %vm774 = vcmp.lt.s32.totalorder %v773, %v752
        %v775 = vsel %vm774, %v773, %v752
        %v776 = vrot.slane %v775, 4
        %vm777 = vcmp.lt.s32.totalorder %v775, %v776
        %v778 = vsel %vm777, %v775, %v776
        %v779 = vrot.slane %v778, 2
        %vm780 = vcmp.lt.s32.totalorder %v778, %v779
        %v781 = vsel %vm780, %v778, %v779
        %v782 = vrot.slane %v781, 1
        %vm783 = vcmp.lt.s32.totalorder %v781, %v782
        %v784 = vsel %vm783, %v781, %v782
        %v785 = vsel %vm657, %v701, %v769
        %v786 = vsel %vm657, %v715, %v784
        %v787 = vcombine.low %v785, %v786
        %v789 = vunpack.c.l.s4 1983009808
        %v790 = vunpack.c.0.s8 %v789
        %v791 = vlaneseq
        %v792 = vshrl.u32 %v791, 7
        %v793 = vsub.s32 %v790, %v792
        %v794 = vrot.slane %v787, %v793
        %795 = vst [vmem:[%s283] sm:$0xf] %v794
        %s796 = smul.u32 2, %s26
        %p797 = scmp.lt.s32.totalorder %s25, 1
        %s798 = scalar_select %p797, %s25, 1
        %p799 = scmp.lt.s32.totalorder %s796, 1
        %s800 = scalar_select %p799, %s796, 1
        %s801 = smul.addr %s798, 10
        %s802 = sadd.s32 %s800, %s801
        %s803 = smul.addr %s802, 8
        %s804 = scalar_lea.vmem %s5, %s803
        %s805 = sand.u32 %s183, 1
        %s806 = scalar_lea.sflag [#allocation3], %s805
        %s807 = sand.u32 %s183, 1
        %s808 = smul.addr %s807, 4
        %s809 = scalar_lea.vmem [#allocation2], %s808
        // Predicated region
        $region41: #{tpu_custom_call.1} parent=39 // pred_check
          %p810 = pneg %p165
        $region42: #{tpu_custom_call.1} parent=39 // pred_check_branch
          %812 = sbr.rel (%p810) target = $region44
        $region43: #{tpu_custom_call.1} parent=39 // pred_region
          %s813 = smul.u32 2, %s26
        $region44: #{tpu_custom_call.1} parent=39 // pred_fallthru
          _
        // Predicated region
        $region45: #{tpu_custom_call.1} parent=39 // pred_check
          %p814 = pneg %p193
        $region46: #{tpu_custom_call.1} parent=39 // pred_check_branch
          %816 = sbr.rel (%p814) target = $region48
        $region47: #{tpu_custom_call.1} parent=39 // pred_region
          %s817 = smul.u32 2, %s26
          %s819 = ssub.s32 64, 64
          %820 = vsyncadd %s806, %s819
          %s821 = smul.addr %s25, 2
          %s822 = sadd.s32 %s817, %s821
          %s823 = smul.addr %s822, 32
          %s824 = scalar_lea.hbm %s6, %s823
          %s826 = sshll.u32 %s809, 4
          %s827 = int_to_ptr.vmem [resolvable:$true] %s826
          %829 = dma.vmem_to_hbm [thread:$0]  %s827, 64, %s824, %s806
        $region48: #{tpu_custom_call.1} parent=39 // pred_fallthru
          _
      $region40: #{tpu_custom_call.1} parent=5 // pred_fallthru
        _
      %p830 = scmp.le.s32.totalorder 2, %s16
      // Predicated region
      $region49: #{tpu_custom_call.1} parent=5 // pred_check
        %p831 = pneg %p830
      $region50: #{tpu_custom_call.1} parent=5 // pred_check_branch
        %833 = sbr.rel (%p831) target = $region52
      $region51: #{tpu_custom_call.1} parent=5 // pred_region
        %s834 = ssub.s32 %s16, 2
        // Predicated region
        $region53: #{tpu_custom_call.1} parent=51 // pred_check
          %p835 = pneg %p171
        $region54: #{tpu_custom_call.1} parent=51 // pred_check_branch
          %837 = sbr.rel (%p835) target = $region56
        $region55: #{tpu_custom_call.1} parent=51 // pred_region
          %s838 = smul.u32 2, %s28
          %p839 = scmp.lt.s32.totalorder %s27, 1
          %s840 = scalar_select %p839, %s27, 1
          %p841 = scmp.lt.s32.totalorder %s838, 1
          %s842 = scalar_select %p841, %s838, 1
          %s843 = smul.addr %s840, 10
          %s844 = sadd.s32 %s842, %s843
          %s845 = smul.addr %s844, 8
          %s846 = scalar_lea.vmem %s5, %s845
        $region56: #{tpu_custom_call.1} parent=51 // pred_fallthru
          _
        // Predicated region
        $region57: #{tpu_custom_call.1} parent=51 // pred_check
          %p847 = pneg %p199
        $region58: #{tpu_custom_call.1} parent=51 // pred_check_branch
          %849 = sbr.rel (%p847) target = $region60
        $region59: #{tpu_custom_call.1} parent=51 // pred_region
          %s850 = sand.u32 %s184, 1
          %s851 = scalar_lea.sflag [#allocation3], %s850
          %s852 = sand.u32 %s184, 1
          %s853 = smul.addr %s852, 4
          %s854 = scalar_lea.vmem [#allocation2], %s853
          %855 = dma.done %s851, 64
        $region60: #{tpu_custom_call.1} parent=51 // pred_fallthru
          _
      $region52: #{tpu_custom_call.1} parent=5 // pred_fallthru
        _
    $region6: #{tpu_custom_call.1} parent=1 // loop_footer
      %s20 = sadd.s32 1, %s16
    $region7: #{tpu_custom_call.1} parent=1 // loop_footer_branch
      %15 = sbr.rel target = $region3
    $region8: #{tpu_custom_call.1} parent=1 // loop_exit
      _
    %856 = vsyncpa [#allocation3], 1
    %s857 = scalar_lea.sflag [#allocation3], 1
    %858 = vsyncpa %s857, 1

</llo_original>
